<compile_context>
chip_gen: v6e
topology: v6e:2x2x1
jax: 0.10.0
libtpu: 0.0.40
codegen_flags: <defaults>
</compile_context>

<pallas_src>
import functools
import math

import jax
import jax.numpy as jnp
from jax import lax
from jax.experimental import pallas as pl
from jax.experimental.pallas import tpu as pltpu

HIDDEN = 128
OUT = 256


# --------------------------------------------------------------------------------------
# Helpers
# --------------------------------------------------------------------------------------
def _round_up(n, m):
    return ((n + m - 1) // m) * m


def _full_spec(shape):
    n = len(shape)
    return pl.BlockSpec(shape, lambda *_idx, _n=n: (0,) * _n)


def _pick_tk(K, B):
    """Query-point tile: large, lane-aligned (x128), <= 2048.  K gets zero-padded to it."""
    TK = min(2048, _round_up(K, 128))
    # v7x has 2 TensorCores: when B == 1 keep >= 2 parallel grid steps if possible.
    if B == 1 and K > 128 and _round_up(K, TK) // TK < 2:
        TK = _round_up(pl.cdiv(K, 2), 128)
    return max(TK, 128)


def _tanh_dtype():
    """bf16 tanh on v6e / v7x (native bf16 EUP); f32 on v5e and older (no bf16 EUP)."""
    try:
        kind = jax.devices()[0].device_kind.lower()
    except Exception:
        return jnp.float32
    if any(v in kind for v in ("v2", "v3", "v4", "v5")):
        return jnp.float32
    return jnp.bfloat16


# --------------------------------------------------------------------------------------
# Stage 1: branch MLP + fold of the trunk's last layer (tiny: M = B rows, pure f32)
# --------------------------------------------------------------------------------------
def branch_kernel(x_ref, bw1, bb1, bw2, bb2, bw3, bb3, bw4, bb4,
                  tw4_ref, tb4_ref, b0_ref, w4b_ref, cb_ref):
    f32 = jnp.float32
    h = x_ref[...]
    h = jnp.tanh(jnp.dot(h, bw1[...], preferred_element_type=f32) + bb1[...])
    h = jnp.tanh(jnp.dot(h, bw2[...], preferred_element_type=f32) + bb2[...])
    h = jnp.tanh(jnp.dot(h, bw3[...], preferred_element_type=f32) + bb3[...])
    branch = jnp.dot(h, bw4[...], preferred_element_type=f32) + bb4[...]        # (B, 256)

    # Algebraically exact fold of trunk layer 4 + einsum('bi,bki->bk'):
    #   res[b,k] = t3[b,k,:] @ w4b[b,:] + cb[b]
    #   w4b[b,i] = sum_m branch[b,m] * tw4[i,m]        (contract the OUT=256 dim)
    w4b_ref[...] = lax.dot_general(
        branch, tw4_ref[...],
        dimension_numbers=(((1,), (1,)), ((), ())),
        preferred_element_type=f32)                                              # (B, 128)
    cb_ref[...] = (jnp.sum(branch * tb4_ref[...], axis=-1, keepdims=True)
                   + b0_ref[...])                                                # (B, 1)


# --------------------------------------------------------------------------------------
# Stage 2: trunk MLP, transposed (lane-dense) orientation, tiled over (batch, K tiles)
# --------------------------------------------------------------------------------------
def trunk_kernel(l_ref, w4b_ref, cb_ref, tw1t, tb1t, tw2t, tb2t, tw3t, tb3t,
                 out_ref, *, t_dim, tanh_dtype):
    f32 = jnp.float32
    bf16 = jnp.bfloat16
    b = pl.program_id(0)

    lt = l_ref[0]                                            # (t_dim, TK) f32, lane-dense

    # Trunk layer 1 on the VPU (t_dim == 2 is too shallow for an MXU pass), transposed:
    #   h[j, k] = tb1[j] + sum_d tw1[d, j] * l[b, k, d]      -> (HIDDEN, TK)
    acc = tb1t[...]                                          # (HIDDEN, 1)
    for d in range(t_dim):
        acc = acc + tw1t[:, d:d + 1] * lt[d:d + 1, :]        # (HIDDEN, TK)
    h = jnp.tanh(acc.astype(tanh_dtype))

    # Layers 2/3: (128,128)@(128,TK) bf16 MXU matmuls, f32 accumulate; tanh in
    # tanh_dtype (bf16 on v6e/v7x where the EUP is the binding unit, f32 on v5e).
    h = jnp.tanh((jnp.dot(tw2t[...], h.astype(bf16),
                          preferred_element_type=f32) + tb2t[...]).astype(tanh_dtype))
    h = jnp.tanh((jnp.dot(tw3t[...], h.astype(bf16),
                          preferred_element_type=f32) + tb3t[...]).astype(tanh_dtype))

    # Folded trunk layer 4 + per-batch inner product, lane-dense epilogue:
    #   res[k] = sum_j w4b[b, j] * h[j, k]                   -> (1, TK)
    w4b = w4b_ref[pl.ds(b, 1), :].astype(bf16)               # (1, HIDDEN)
    res = jnp.dot(w4b, h.astype(bf16), preferred_element_type=f32)    # (1, TK)
    out_ref[0] = res + cb_ref[b, 0]                          # (1, TK) lane-dense store


# --------------------------------------------------------------------------------------
# Wrapper
# --------------------------------------------------------------------------------------
def deeponet_forward(x, l, params):
    """x: (B, b_dim) f32, l: (B, K, t_dim) f32, params: flat tuple of 17 arrays."""
    (bw1, bb1, bw2, bb2, bw3, bb3, bw4, bb4,
     tw1, tb1, tw2, tb2, tw3, tb3, tw4, tb4, b0) = params
    B, _ = x.shape
    _, K, t_dim = l.shape

    # ---- stage 1: branch + fold (single shot, all-resident, tiny) ----
    br_args = (x, bw1, bb1, bw2, bb2, bw3, bb3, bw4, bb4, tw4, tb4, b0)
    w4b, cb = pl.pallas_call(
        branch_kernel,
        out_shape=(jax.ShapeDtypeStruct((B, HIDDEN), jnp.float32),
                   jax.ShapeDtypeStruct((B, 1), jnp.float32)),
        grid_spec=pltpu.PrefetchScalarGridSpec(
            num_scalar_prefetch=0,
            grid=(1,),
            in_specs=[_full_spec(a.shape) for a in br_args],
            out_specs=(_full_spec((B, HIDDEN)), _full_spec((B, 1))),
        ),
        compiler_params=pltpu.CompilerParams(
            dimension_semantics=("arbitrary",)),
    )(*br_args)

    # ---- stage 2: trunk MLP, grid tiled over (batch, query-point tiles) ----
    TK = _pick_tk(K, B)
    K_pad = _round_up(K, TK)
    grid = (B, K_pad // TK)

    # Query points transposed to (B, t_dim, K_pad): TK lives on the lane axis.
    l_t = jnp.transpose(l, (0, 2, 1))
    if K_pad != K:
        l_t = jnp.pad(l_t, ((0, 0), (0, 0), (0, K_pad - K)))

    # Trunk weights in transposed orientation (one-time layout plumbing).
    tanh_dtype = _tanh_dtype()
    tw1t = tw1.T                                             # (HIDDEN, t_dim) f32
    tb1t = tb1.T                                             # (HIDDEN, 1)     f32
    tw2t = tw2.T.astype(jnp.bfloat16)                        # (HIDDEN, HIDDEN) bf16
    tb2t = tb2.T                                             # (HIDDEN, 1)     f32
    tw3t = tw3.T.astype(jnp.bfloat16)
    tb3t = tb3.T

    in_specs = [
        pl.BlockSpec((1, t_dim, TK), lambda b, kt: (b, 0, kt)),   # l tile (lane-dense)
        _full_spec((B, HIDDEN)),                                  # w4b (tiny, resident)
        pl.BlockSpec(memory_space=pltpu.MemorySpace.SMEM),        # cb per-batch scalars
        _full_spec(tw1t.shape), _full_spec(tb1t.shape),           # resident weights
        _full_spec(tw2t.shape), _full_spec(tb2t.shape),
        _full_spec(tw3t.shape), _full_spec(tb3t.shape),
    ]
    out_spec = pl.BlockSpec((1, 1, TK), lambda b, kt: (b, 0, kt))

    kernel = functools.partial(trunk_kernel, t_dim=t_dim, tanh_dtype=tanh_dtype)
    out = pl.pallas_call(
        kernel,
        out_shape=jax.ShapeDtypeStruct((B, 1, K_pad), jnp.float32),
        grid_spec=pltpu.PrefetchScalarGridSpec(
            num_scalar_prefetch=0,
            grid=grid,
            in_specs=in_specs,
            out_specs=out_spec,
        ),
        compiler_params=pltpu.CompilerParams(
            dimension_semantics=("parallel", "parallel")),
    )(l_t, w4b, cb, tw1t, tb1t, tw2t, tb2t, tw3t, tb3t)

    # (B, 1, K_pad) -> (B, K, 1): slice off the pad, restore the module's output shape.
    return out[:, 0, :K][..., None]


# --------------------------------------------------------------------------------------
# Parameter init (PyTorch nn.Linear style) + pure-JAX f32 reference
# --------------------------------------------------------------------------------------
def init_linear(key, fan_in, fan_out):
    kw, kb = jax.random.split(key)
    bound = 1.0 / math.sqrt(fan_in)
    w = jax.random.uniform(kw, (fan_in, fan_out), jnp.float32, -bound, bound)
    b = jax.random.uniform(kb, (1, fan_out), jnp.float32, -bound, bound)
    return w, b


def init_params(key, b_dim, t_dim):
    keys = jax.random.split(key, 8)
    bw1, bb1 = init_linear(keys[0], b_dim, HIDDEN)
    bw2, bb2 = init_linear(keys[1], HIDDEN, HIDDEN)
    bw3, bb3 = init_linear(keys[2], HIDDEN, HIDDEN)
    bw4, bb4 = init_linear(keys[3], HIDDEN, OUT)
    tw1, tb1 = init_linear(keys[4], t_dim, HIDDEN)
    tw2, tb2 = init_linear(keys[5], HIDDEN, HIDDEN)
    tw3, tb3 = init_linear(keys[6], HIDDEN, HIDDEN)
    tw4, tb4 = init_linear(keys[7], HIDDEN, OUT)
    b0 = jnp.zeros((1, 1), jnp.float32)   # Parameter(torch.zeros(1))
    return (bw1, bb1, bw2, bb2, bw3, bb3, bw4, bb4,
            tw1, tb1, tw2, tb2, tw3, tb3, tw4, tb4, b0)


def deeponet_reference(x, l, params):
    (bw1, bb1, bw2, bb2, bw3, bb3, bw4, bb4,
     tw1, tb1, tw2, tb2, tw3, tb3, tw4, tb4, b0) = params
    h = jnp.tanh(x @ bw1 + bb1)
    h = jnp.tanh(h @ bw2 + bb2)
    h = jnp.tanh(h @ bw3 + bb3)
    branch = h @ bw4 + bb4                                  # (B, 256)
    t = jnp.tanh(l @ tw1 + tb1)
    t = jnp.tanh(t @ tw2 + tb2)
    t = jnp.tanh(t @ tw3 + tb3)
    trunk = t @ tw4 + tb4                                   # (B, K, 256)
    res = jnp.einsum('bi,bki->bk', branch, trunk)
    return res[..., None] + b0[0, 0]


if __name__ == "__main__":
    B, K = 2, 8
    b_dim, t_dim = 16, 2     # 2d-singular DeepONet: trunk input is a 2-D coordinate

    key = jax.random.PRNGKey(0)
    kx, kl, kp = jax.random.split(key, 3)
    x = jax.random.normal(kx, (B, b_dim), jnp.float32)
    l = jax.random.normal(kl, (B, K, t_dim), jnp.float32)
    params = init_params(kp, b_dim, t_dim)

    out = deeponet_forward(x, l, params)
    out = jax.block_until_ready(out)

    ref = deeponet_reference(x, l, params)
    assert out.shape == (B, K, 1), out.shape
    max_err = float(jnp.max(jnp.abs(out - ref)))
    # bf16 MXU matmuls (+ bf16 tanh on v6e/v7x) in the trunk -> loosened tolerance
    # vs. the pure-f32 reference.
    assert jnp.allclose(out, ref, rtol=5e-2, atol=5e-2), max_err
    print("KERNEL_OK")
</pallas_src>

<mosaic_0001>
module attributes {stable_mosaic.version = 11 : i64} {
  func.func @branch_kernel(%arg0: i32, %arg1: memref<2x16xf32, #tpu.memory_space<vmem>>, %arg2: memref<16x128xf32, #tpu.memory_space<vmem>>, %arg3: memref<1x128xf32, #tpu.memory_space<vmem>>, %arg4: memref<128x128xf32, #tpu.memory_space<vmem>>, %arg5: memref<1x128xf32, #tpu.memory_space<vmem>>, %arg6: memref<128x128xf32, #tpu.memory_space<vmem>>, %arg7: memref<1x128xf32, #tpu.memory_space<vmem>>, %arg8: memref<128x256xf32, #tpu.memory_space<vmem>>, %arg9: memref<1x256xf32, #tpu.memory_space<vmem>>, %arg10: memref<128x256xf32, #tpu.memory_space<vmem>>, %arg11: memref<1x256xf32, #tpu.memory_space<vmem>>, %arg12: memref<1x1xf32, #tpu.memory_space<vmem>>, %arg13: memref<2x128xf32, #tpu.memory_space<vmem>>, %arg14: memref<2x1xf32, #tpu.memory_space<vmem>>) attributes {dimension_semantics = [#tpu.dimension_semantics<arbitrary>], iteration_bounds = array<i64: 1>, scalar_prefetch = 0 : i64, scratch_operands = 0 : i64, tpu.core_type = #tpu.core_type<tc>, window_params = [{pipeline_mode = #tpu.pipeline_mode<synchronous>, transform_indices = @transform_0, window_bounds = array<i64: 2, 16>}, {pipeline_mode = #tpu.pipeline_mode<synchronous>, transform_indices = @transform_1, window_bounds = array<i64: 16, 128>}, {pipeline_mode = #tpu.pipeline_mode<synchronous>, transform_indices = @transform_2, window_bounds = array<i64: 1, 128>}, {pipeline_mode = #tpu.pipeline_mode<synchronous>, transform_indices = @transform_3, window_bounds = array<i64: 128, 128>}, {pipeline_mode = #tpu.pipeline_mode<synchronous>, transform_indices = @transform_4, window_bounds = array<i64: 1, 128>}, {pipeline_mode = #tpu.pipeline_mode<synchronous>, transform_indices = @transform_5, window_bounds = array<i64: 128, 128>}, {pipeline_mode = #tpu.pipeline_mode<synchronous>, transform_indices = @transform_6, window_bounds = array<i64: 1, 128>}, {pipeline_mode = #tpu.pipeline_mode<synchronous>, transform_indices = @transform_7, window_bounds = array<i64: 128, 256>}, {pipeline_mode = #tpu.pipeline_mode<synchronous>, transform_indices = @transform_8, window_bounds = array<i64: 1, 256>}, {pipeline_mode = #tpu.pipeline_mode<synchronous>, transform_indices = @transform_9, window_bounds = array<i64: 128, 256>}, {pipeline_mode = #tpu.pipeline_mode<synchronous>, transform_indices = @transform_10, window_bounds = array<i64: 1, 256>}, {pipeline_mode = #tpu.pipeline_mode<synchronous>, transform_indices = @transform_11, window_bounds = array<i64: 1, 1>}, {pipeline_mode = #tpu.pipeline_mode<synchronous>, transform_indices = @transform_12, window_bounds = array<i64: 2, 128>}, {pipeline_mode = #tpu.pipeline_mode<synchronous>, transform_indices = @transform_13, window_bounds = array<i64: 2, 1>}]} {
    %c0 = arith.constant 0 : index
    %c0_0 = arith.constant 0 : index
    %0 = vector.load %arg1[%c0, %c0_0] : memref<2x16xf32, #tpu.memory_space<vmem>>, vector<2x16xf32>
    %c0_1 = arith.constant 0 : index
    %c0_2 = arith.constant 0 : index
    %1 = vector.load %arg2[%c0_1, %c0_2] : memref<16x128xf32, #tpu.memory_space<vmem>>, vector<16x128xf32>
    %cst = arith.constant dense<0.000000e+00> : vector<2x128xf32>
    %2 = tpu.matmul %0, %1, %cst {dimension_numbers = #tpu.dot_dimension_numbers<[1], [0], [0], [1], [0, 0, 1, 1], [], []>} : vector<2x16xf32>, vector<16x128xf32>, vector<2x128xf32> -> vector<2x128xf32>
    %c0_3 = arith.constant 0 : index
    %c0_4 = arith.constant 0 : index
    %3 = vector.load %arg3[%c0_3, %c0_4] : memref<1x128xf32, #tpu.memory_space<vmem>>, vector<1x128xf32>
    %4 = vector.broadcast %3 : vector<1x128xf32> to vector<2x128xf32>
    %5 = arith.addf %2, %4 : vector<2x128xf32>
    %6 = math.tanh %5 : vector<2x128xf32>
    %c0_5 = arith.constant 0 : index
    %c0_6 = arith.constant 0 : index
    %7 = vector.load %arg4[%c0_5, %c0_6] : memref<128x128xf32, #tpu.memory_space<vmem>>, vector<128x128xf32>
    %cst_7 = arith.constant dense<0.000000e+00> : vector<2x128xf32>
    %8 = tpu.matmul %6, %7, %cst_7 {dimension_numbers = #tpu.dot_dimension_numbers<[1], [0], [0], [1], [0, 0, 1, 1], [], []>} : vector<2x128xf32>, vector<128x128xf32>, vector<2x128xf32> -> vector<2x128xf32>
    %c0_8 = arith.constant 0 : index
    %c0_9 = arith.constant 0 : index
    %9 = vector.load %arg5[%c0_8, %c0_9] : memref<1x128xf32, #tpu.memory_space<vmem>>, vector<1x128xf32>
    %10 = vector.broadcast %9 : vector<1x128xf32> to vector<2x128xf32>
    %11 = arith.addf %8, %10 : vector<2x128xf32>
    %12 = math.tanh %11 : vector<2x128xf32>
    %c0_10 = arith.constant 0 : index
    %c0_11 = arith.constant 0 : index
    %13 = vector.load %arg6[%c0_10, %c0_11] : memref<128x128xf32, #tpu.memory_space<vmem>>, vector<128x128xf32>
    %cst_12 = arith.constant dense<0.000000e+00> : vector<2x128xf32>
    %14 = tpu.matmul %12, %13, %cst_12 {dimension_numbers = #tpu.dot_dimension_numbers<[1], [0], [0], [1], [0, 0, 1, 1], [], []>} : vector<2x128xf32>, vector<128x128xf32>, vector<2x128xf32> -> vector<2x128xf32>
    %c0_13 = arith.constant 0 : index
    %c0_14 = arith.constant 0 : index
    %15 = vector.load %arg7[%c0_13, %c0_14] : memref<1x128xf32, #tpu.memory_space<vmem>>, vector<1x128xf32>
    %16 = vector.broadcast %15 : vector<1x128xf32> to vector<2x128xf32>
    %17 = arith.addf %14, %16 : vector<2x128xf32>
    %18 = math.tanh %17 : vector<2x128xf32>
    %c0_15 = arith.constant 0 : index
    %c0_16 = arith.constant 0 : index
    %19 = vector.load %arg8[%c0_15, %c0_16] : memref<128x256xf32, #tpu.memory_space<vmem>>, vector<128x256xf32>
    %cst_17 = arith.constant dense<0.000000e+00> : vector<2x256xf32>
    %20 = tpu.matmul %18, %19, %cst_17 {dimension_numbers = #tpu.dot_dimension_numbers<[1], [0], [0], [1], [0, 0, 1, 1], [], []>} : vector<2x128xf32>, vector<128x256xf32>, vector<2x256xf32> -> vector<2x256xf32>
    %c0_18 = arith.constant 0 : index
    %c0_19 = arith.constant 0 : index
    %21 = vector.load %arg9[%c0_18, %c0_19] : memref<1x256xf32, #tpu.memory_space<vmem>>, vector<1x256xf32>
    %22 = vector.broadcast %21 : vector<1x256xf32> to vector<2x256xf32>
    %23 = arith.addf %20, %22 : vector<2x256xf32>
    %c0_20 = arith.constant 0 : index
    %c0_21 = arith.constant 0 : index
    %24 = vector.load %arg10[%c0_20, %c0_21] : memref<128x256xf32, #tpu.memory_space<vmem>>, vector<128x256xf32>
    %cst_22 = arith.constant dense<0.000000e+00> : vector<2x128xf32>
    %25 = tpu.matmul %23, %24, %cst_22 {dimension_numbers = #tpu.dot_dimension_numbers<[1], [1], [0], [0], [0, 0, 1, 0], [], []>} : vector<2x256xf32>, vector<128x256xf32>, vector<2x128xf32> -> vector<2x128xf32>
    %c0_23 = arith.constant 0 : index
    %c0_24 = arith.constant 0 : index
    %26 = vector.load %arg13[%c0_23, %c0_24] : memref<2x128xf32, #tpu.memory_space<vmem>>, vector<2x128xf32>
    tpu.vector_store %arg13[%c0_23, %c0_24], %25 {strides = array<i32>} : memref<2x128xf32, #tpu.memory_space<vmem>>, vector<2x128xf32>,
    %c0_25 = arith.constant 0 : index
    %c0_26 = arith.constant 0 : index
    %27 = vector.load %arg11[%c0_25, %c0_26] : memref<1x256xf32, #tpu.memory_space<vmem>>, vector<1x256xf32>
    %28 = vector.broadcast %27 : vector<1x256xf32> to vector<2x256xf32>
    %29 = arith.mulf %23, %28 : vector<2x256xf32>
    %cst_27 = arith.constant dense<0.000000e+00> : vector<2xf32>
    %30 = vector.multi_reduction <add>, %29, %cst_27 [1] : vector<2x256xf32> to vector<2xf32>
    %31 = vector.shape_cast %30 : vector<2xf32> to vector<2x1xf32>
    %c0_28 = arith.constant 0 : index
    %c0_29 = arith.constant 0 : index
    %32 = vector.load %arg12[%c0_28, %c0_29] : memref<1x1xf32, #tpu.memory_space<vmem>>, vector<1x1xf32>
    %33 = vector.broadcast %32 : vector<1x1xf32> to vector<2x1xf32>
    %34 = arith.addf %31, %33 : vector<2x1xf32>
    %c0_30 = arith.constant 0 : index
    %c0_31 = arith.constant 0 : index
    %35 = vector.load %arg14[%c0_30, %c0_31] : memref<2x1xf32, #tpu.memory_space<vmem>>, vector<2x1xf32>
    tpu.vector_store %arg14[%c0_30, %c0_31], %34 {strides = array<i32>} : memref<2x1xf32, #tpu.memory_space<vmem>>, vector<2x1xf32>,
    return
  }
  func.func @transform_0(%arg0: i32) -> (i32, i32) {
    %c0_i32 = arith.constant 0 : i32
    %c0_i32_0 = arith.constant 0 : i32
    %c0_i32_1 = arith.constant 0 : i32
    return %c0_i32, %c0_i32_0 : i32, i32
  }
  func.func @transform_1(%arg0: i32) -> (i32, i32) {
    %c0_i32 = arith.constant 0 : i32
    %c0_i32_0 = arith.constant 0 : i32
    %c0_i32_1 = arith.constant 0 : i32
    return %c0_i32, %c0_i32_0 : i32, i32
  }
  func.func @transform_2(%arg0: i32) -> (i32, i32) {
    %c0_i32 = arith.constant 0 : i32
    %c0_i32_0 = arith.constant 0 : i32
    %c0_i32_1 = arith.constant 0 : i32
    return %c0_i32, %c0_i32_0 : i32, i32
  }
  func.func @transform_3(%arg0: i32) -> (i32, i32) {
    %c0_i32 = arith.constant 0 : i32
    %c0_i32_0 = arith.constant 0 : i32
    %c0_i32_1 = arith.constant 0 : i32
    return %c0_i32, %c0_i32_0 : i32, i32
  }
  func.func @transform_4(%arg0: i32) -> (i32, i32) {
    %c0_i32 = arith.constant 0 : i32
    %c0_i32_0 = arith.constant 0 : i32
    %c0_i32_1 = arith.constant 0 : i32
    return %c0_i32, %c0_i32_0 : i32, i32
  }
  func.func @transform_5(%arg0: i32) -> (i32, i32) {
    %c0_i32 = arith.constant 0 : i32
    %c0_i32_0 = arith.constant 0 : i32
    %c0_i32_1 = arith.constant 0 : i32
    return %c0_i32, %c0_i32_0 : i32, i32
  }
  func.func @transform_6(%arg0: i32) -> (i32, i32) {
    %c0_i32 = arith.constant 0 : i32
    %c0_i32_0 = arith.constant 0 : i32
    %c0_i32_1 = arith.constant 0 : i32
    return %c0_i32, %c0_i32_0 : i32, i32
  }
  func.func @transform_7(%arg0: i32) -> (i32, i32) {
    %c0_i32 = arith.constant 0 : i32
    %c0_i32_0 = arith.constant 0 : i32
    %c0_i32_1 = arith.constant 0 : i32
    return %c0_i32, %c0_i32_0 : i32, i32
  }
  func.func @transform_8(%arg0: i32) -> (i32, i32) {
    %c0_i32 = arith.constant 0 : i32
    %c0_i32_0 = arith.constant 0 : i32
    %c0_i32_1 = arith.constant 0 : i32
    return %c0_i32, %c0_i32_0 : i32, i32
  }
  func.func @transform_9(%arg0: i32) -> (i32, i32) {
    %c0_i32 = arith.constant 0 : i32
    %c0_i32_0 = arith.constant 0 : i32
    %c0_i32_1 = arith.constant 0 : i32
    return %c0_i32, %c0_i32_0 : i32, i32
  }
  func.func @transform_10(%arg0: i32) -> (i32, i32) {
    %c0_i32 = arith.constant 0 : i32
    %c0_i32_0 = arith.constant 0 : i32
    %c0_i32_1 = arith.constant 0 : i32
    return %c0_i32, %c0_i32_0 : i32, i32
  }
  func.func @transform_11(%arg0: i32) -> (i32, i32) {
    %c0_i32 = arith.constant 0 : i32
    %c0_i32_0 = arith.constant 0 : i32
    %c0_i32_1 = arith.constant 0 : i32
    return %c0_i32, %c0_i32_0 : i32, i32
  }
  func.func @transform_12(%arg0: i32) -> (i32, i32) {
    %c0_i32 = arith.constant 0 : i32
    %c0_i32_0 = arith.constant 0 : i32
    %c0_i32_1 = arith.constant 0 : i32
    return %c0_i32, %c0_i32_0 : i32, i32
  }
  func.func @transform_13(%arg0: i32) -> (i32, i32) {
    %c0_i32 = arith.constant 0 : i32
    %c0_i32_0 = arith.constant 0 : i32
    %c0_i32_1 = arith.constant 0 : i32
    return %c0_i32, %c0_i32_0 : i32, i32
  }
}

</mosaic_0001>

<llo_original>
// kernel: tpu_custom_call.1
$region0: #{tpu_custom_call.1}
  #allocation0 [shape = 'u32[]', space=smem, size = 0x4, offset = 0x4, fixed_abs, tag = 'smem constant byte address 0x4 - core index']
  #allocation1 [shape = 'u32[144,128]{1,0:T(1,128)}', space=vmem, size = 0x12000, scoped, tag = 'internal scratch']
  #allocation2 [shape = 'f32[1,1]{1,0:T(1,128)S(1)}', space=vmem, size = 0x200, scoped, tag = 'scoped memory for tpu_custom_call.1']
  %s0 = inlined_call_operand.vmem [shape: f32[2,16], index: 0, kind: input, shape index: {}]
  %s1 = inlined_call_operand.hbm [shape: f32[16,128], index: 1, kind: input, shape index: {}]
  %s2 = inlined_call_operand.vmem [shape: f32[1,128], index: 2, kind: input, shape index: {}]
  %s3 = inlined_call_operand.hbm [shape: f32[128,128], index: 3, kind: input, shape index: {}]
  %s4 = inlined_call_operand.vmem [shape: f32[1,128], index: 4, kind: input, shape index: {}]
  %s5 = inlined_call_operand.hbm [shape: f32[128,128], index: 5, kind: input, shape index: {}]
  %s6 = inlined_call_operand.vmem [shape: f32[1,128], index: 6, kind: input, shape index: {}]
  %s7 = inlined_call_operand.hbm [shape: f32[128,256], index: 7, kind: input, shape index: {}]
  %s8 = inlined_call_operand.vmem [shape: f32[1,256], index: 8, kind: input, shape index: {}]
  %s9 = inlined_call_operand.hbm [shape: f32[128,256], index: 9, kind: input, shape index: {}]
  %s10 = inlined_call_operand.vmem [shape: f32[1,256], index: 10, kind: input, shape index: {}]
  %s11 = inlined_call_operand.<no memory space> [shape: f32[1,1], index: 11, kind: input, shape index: {}]
  %s12 = inlined_call_operand.hbm [shape: f32[2,128], index: 12, kind: output, shape index: {0}]
  %s13 = inlined_call_operand.vmem [shape: f32[2,1], index: 13, kind: output, shape index: {1}]
  %14 = xla_tuple %s12, %s13
  %s15 = sld [smem:[#allocation0]]
  $region86: #{tpu_custom_call.1} parent=0
    _
  %s17 = ssub.s32 1, %s15
  %s18 = scalar_select 0, %s17, %s15
  %v19 = vstv %s11
  %20 = vst [vmem:[#allocation2] sm:$0x1] %v19
  $region1: #{tpu_custom_call.1} parent=0
    #allocation3 [shape = 'u8[8192]{0}', space=vmem, size = 0x2000, scoped, tag = 'input window, operand 1, single buffered']
    #allocation4 [shape = 's32[1]{0}', space=sflag, size = 0x4, scoped, tag = 'scoped memory for tpu_custom_call.1']
    #allocation5 [shape = 's32[1]{0}', space=sflag, size = 0x4, scoped, tag = 'scoped memory for tpu_custom_call.1']
    #allocation6 [shape = 'u8[65536]{0}', space=vmem, size = 0x10000, scoped, tag = 'input window, operand 3, single buffered']
    #allocation7 [shape = 's32[1]{0}', space=sflag, size = 0x4, scoped, tag = 'scoped memory for tpu_custom_call.1']
    #allocation8 [shape = 'u8[65536]{0}', space=vmem, size = 0x10000, scoped, tag = 'input window, operand 5, single buffered']
    #allocation9 [shape = 'u8[131072]{0}', space=vmem, size = 0x20000, scoped, tag = 'input window, operand 7, single buffered']
    #allocation10 [shape = 's32[1]{0}', space=sflag, size = 0x4, scoped, tag = 'scoped memory for tpu_custom_call.1']
    #allocation11 [shape = 'u8[131072]{0}', space=vmem, size = 0x20000, scoped, tag = 'input window, operand 9, single buffered']
    #allocation12 [shape = 'u8[1024]{0}', space=vmem, size = 0x400, scoped, tag = 'output window, operand 0, single buffered']
    %21 = vsyncpa [#allocation4], 0
    %22 = vsyncpa [#allocation7], 0
    %23 = vsyncpa [#allocation10], 0
    %24 = vsyncpa [#allocation5], 0
    // Predicated region
    $region2: #{tpu_custom_call.1} parent=1 // pred_check
      _
    $region3: #{tpu_custom_call.1} parent=1 // pred_check_branch
      %26 = sbr.rel (0) target = $region5
    $region4: #{tpu_custom_call.1} parent=1 // pred_region
      _
    $region5: #{tpu_custom_call.1} parent=1 // pred_fallthru
      _
    // Predicated region
    $region6: #{tpu_custom_call.1} parent=1 // pred_check
      _
    $region7: #{tpu_custom_call.1} parent=1 // pred_check_branch
      %28 = sbr.rel (0) target = $region9
    $region8: #{tpu_custom_call.1} parent=1 // pred_region
      %s30 = ssub.s32 256, 256
      %31 = vsyncadd [#allocation4], %s30
      %s32 = sshll.u32 [#allocation3], 4
      %s33 = int_to_ptr.vmem [resolvable:$true] %s32
      %38 = dma.hbm_to_vmem [thread:$0]  %s1, 256, %s33, [#allocation4], 128, 128, 8
    $region9: #{tpu_custom_call.1} parent=1 // pred_fallthru
      _
    // Predicated region
    $region10: #{tpu_custom_call.1} parent=1 // pred_check
      _
    $region11: #{tpu_custom_call.1} parent=1 // pred_check_branch
      %40 = sbr.rel (0) target = $region13
    $region12: #{tpu_custom_call.1} parent=1 // pred_region
      _
    $region13: #{tpu_custom_call.1} parent=1 // pred_fallthru
      _
    // Predicated region
    $region14: #{tpu_custom_call.1} parent=1 // pred_check
      _
    $region15: #{tpu_custom_call.1} parent=1 // pred_check_branch
      %42 = sbr.rel (0) target = $region17
    $region16: #{tpu_custom_call.1} parent=1 // pred_region
      %s44 = ssub.s32 2048, 2048
      %45 = vsyncadd [#allocation7], %s44
      %s46 = sshll.u32 [#allocation6], 4
      %s47 = int_to_ptr.vmem [resolvable:$true] %s46
      %52 = dma.hbm_to_vmem [thread:$0]  %s3, 2048, %s47, [#allocation7], 128, 128, 8
    $region17: #{tpu_custom_call.1} parent=1 // pred_fallthru
      _
    // Predicated region
    $region18: #{tpu_custom_call.1} parent=1 // pred_check
      _
    $region19: #{tpu_custom_call.1} parent=1 // pred_check_branch
      %54 = sbr.rel (0) target = $region21
    $region20: #{tpu_custom_call.1} parent=1 // pred_region
      _
    $region21: #{tpu_custom_call.1} parent=1 // pred_fallthru
      _
    // Predicated region
    $region22: #{tpu_custom_call.1} parent=1 // pred_check
      _
    $region23: #{tpu_custom_call.1} parent=1 // pred_check_branch
      %56 = sbr.rel (0) target = $region25
    $region24: #{tpu_custom_call.1} parent=1 // pred_region
      %s58 = ssub.s32 2048, 2048
      %59 = vsyncadd [#allocation7], %s58
      %s60 = sshll.u32 [#allocation8], 4
      %s61 = int_to_ptr.vmem [resolvable:$true] %s60
      %66 = dma.hbm_to_vmem [thread:$0]  %s5, 2048, %s61, [#allocation7], 128, 128, 8
    $region25: #{tpu_custom_call.1} parent=1 // pred_fallthru
      _
    // Predicated region
    $region26: #{tpu_custom_call.1} parent=1 // pred_check
      _
    $region27: #{tpu_custom_call.1} parent=1 // pred_check_branch
      %68 = sbr.rel (0) target = $region29
    $region28: #{tpu_custom_call.1} parent=1 // pred_region
      _
    $region29: #{tpu_custom_call.1} parent=1 // pred_fallthru
      _
    // Predicated region
    $region30: #{tpu_custom_call.1} parent=1 // pred_check
      _
    $region31: #{tpu_custom_call.1} parent=1 // pred_check_branch
      %70 = sbr.rel (0) target = $region33
    $region32: #{tpu_custom_call.1} parent=1 // pred_region
      %s72 = ssub.s32 4096, 4096
      %73 = vsyncadd [#allocation10], %s72
      %s74 = sshll.u32 [#allocation9], 4
      %s75 = int_to_ptr.vmem [resolvable:$true] %s74
      %80 = dma.hbm_to_vmem [thread:$0]  %s7, 4096, %s75, [#allocation10], 256, 256, 16
    $region33: #{tpu_custom_call.1} parent=1 // pred_fallthru
      _
    // Predicated region
    $region34: #{tpu_custom_call.1} parent=1 // pred_check
      _
    $region35: #{tpu_custom_call.1} parent=1 // pred_check_branch
      %82 = sbr.rel (0) target = $region37
    $region36: #{tpu_custom_call.1} parent=1 // pred_region
      _
    $region37: #{tpu_custom_call.1} parent=1 // pred_fallthru
      _
    // Predicated region
    $region38: #{tpu_custom_call.1} parent=1 // pred_check
      _
    $region39: #{tpu_custom_call.1} parent=1 // pred_check_branch
      %84 = sbr.rel (0) target = $region41
    $region40: #{tpu_custom_call.1} parent=1 // pred_region
      %s86 = ssub.s32 4096, 4096
      %87 = vsyncadd [#allocation10], %s86
      %s88 = sshll.u32 [#allocation11], 4
      %s89 = int_to_ptr.vmem [resolvable:$true] %s88
      %94 = dma.hbm_to_vmem [thread:$0]  %s9, 4096, %s89, [#allocation10], 256, 256, 16
    $region41: #{tpu_custom_call.1} parent=1 // pred_fallthru
      _
    // Predicated region
    $region42: #{tpu_custom_call.1} parent=1 // pred_check
      _
    $region43: #{tpu_custom_call.1} parent=1 // pred_check_branch
      %96 = sbr.rel (0) target = $region45
    $region44: #{tpu_custom_call.1} parent=1 // pred_region
      _
    $region45: #{tpu_custom_call.1} parent=1 // pred_fallthru
      _
    // Predicated region
    $region46: #{tpu_custom_call.1} parent=1 // pred_check
      _
    $region47: #{tpu_custom_call.1} parent=1 // pred_check_branch
      %98 = sbr.rel (0) target = $region49
    $region48: #{tpu_custom_call.1} parent=1 // pred_region
      _
    $region49: #{tpu_custom_call.1} parent=1 // pred_fallthru
      _
    // Predicated region
    $region50: #{tpu_custom_call.1} parent=1 // pred_check
      _
    $region51: #{tpu_custom_call.1} parent=1 // pred_check_branch
      %100 = sbr.rel (0) target = $region53
    $region52: #{tpu_custom_call.1} parent=1 // pred_region
      %101 = dma.done [#allocation4], 256
    $region53: #{tpu_custom_call.1} parent=1 // pred_fallthru
      _
    // Predicated region
    $region54: #{tpu_custom_call.1} parent=1 // pred_check
      _
    $region55: #{tpu_custom_call.1} parent=1 // pred_check_branch
      %103 = sbr.rel (0) target = $region57
    $region56: #{tpu_custom_call.1} parent=1 // pred_region
      %104 = dma.done [#allocation7], 2048
    $region57: #{tpu_custom_call.1} parent=1 // pred_fallthru
      _
    // Predicated region
    $region58: #{tpu_custom_call.1} parent=1 // pred_check
      _
    $region59: #{tpu_custom_call.1} parent=1 // pred_check_branch
      %106 = sbr.rel (0) target = $region61
    $region60: #{tpu_custom_call.1} parent=1 // pred_region
      %107 = dma.done [#allocation7], 2048
    $region61: #{tpu_custom_call.1} parent=1 // pred_fallthru
      _
    // Predicated region
    $region62: #{tpu_custom_call.1} parent=1 // pred_check
      _
    $region63: #{tpu_custom_call.1} parent=1 // pred_check_branch
      %109 = sbr.rel (0) target = $region65
    $region64: #{tpu_custom_call.1} parent=1 // pred_region
      %110 = dma.done [#allocation10], 4096
    $region65: #{tpu_custom_call.1} parent=1 // pred_fallthru
      _
    // Predicated region
    $region66: #{tpu_custom_call.1} parent=1 // pred_check
      _
    $region67: #{tpu_custom_call.1} parent=1 // pred_check_branch
      %112 = sbr.rel (0) target = $region69
    $region68: #{tpu_custom_call.1} parent=1 // pred_region
      %113 = dma.done [#allocation10], 4096
    $region69: #{tpu_custom_call.1} parent=1 // pred_fallthru
      _
    %v114 = vld [vmem:[%s0] sm:$0x3]
    %v115 = vld [vmem:[#allocation3] sm:$0xff]
    %v116 = vld [vmem:[#allocation3 + $0x8] sm:$0xff]
    %v117 = vld [vmem:[%s2] sm:$0x1]
    %v119 = vlaneseq
    %v120 = vshrl.u32 %v119, 7
    %v121 = vsub.s32 0, %v120
    %v122 = vrot.slane %v117, %v121
    %vm124 = vcmask 130048
    %v126 = vsel %vm124, %v114, 0
    %128 = vmatprep.subr.mxu0 0.0
    %129 = vmatpush1.msra.mxu0 0.0
    %130 = vmatprep.subr.mxu0 0.0
    %131 = vmatpush1.msra.mxu0 0.0
    %132 = vmatprep.subr.mxu0 0.0
    %133 = vmatpush1.msra.mxu0 0.0
    %134 = vmatprep.subr.mxu0 0.0
    %135 = vmatpush1.msra.mxu0 0.0
    %136 = vmatprep.subr.mxu0 0.0
    %137 = vmatpush1.msra.mxu0 0.0
    %138 = vmatprep.subr.mxu0 0.0
    %139 = vmatpush1.msra.mxu0 0.0
    %140 = vmatprep.subr.mxu0 0.0
    %141 = vmatpush1.msra.mxu0 0.0
    %142 = vmatprep.subr.mxu0 0.0
    %143 = vmatpush1.msra.mxu0 0.0
    %144 = vmatprep.subr.mxu0 0.0
    %145 = vmatpush1.msra.mxu0 0.0
    %146 = vmatprep.subr.mxu0 0.0
    %147 = vmatpush1.msra.mxu0 0.0
    %148 = vmatprep.subr.mxu0 0.0
    %149 = vmatpush1.msra.mxu0 0.0
    %150 = vmatprep.subr.mxu0 0.0
    %151 = vmatpush1.msra.mxu0 0.0
    %152 = vmatprep.subr.mxu0 0.0
    %153 = vmatpush1.msra.mxu0 0.0
    %154 = vmatprep.subr.mxu0 0.0
    %155 = vmatpush1.msra.mxu0 0.0
    %156 = vmatprep.subr.mxu0 0.0
    %157 = vmatpush1.msra.mxu0 %v116
    %158 = vmatprep.subr.mxu0 0.0
    %159 = vmatpush1.msra.mxu0 %v115
    %160 = vmatprep.subr.mxu0 0.0
    %161 = vmatpush2.msra.mxu0 0.0
    %162 = vmatprep.subr.mxu0 0.0
    %163 = vmatpush2.msra.mxu0 0.0
    %164 = vmatprep.subr.mxu0 0.0
    %165 = vmatpush2.msra.mxu0 0.0
    %166 = vmatprep.subr.mxu0 0.0
    %167 = vmatpush2.msra.mxu0 0.0
    %168 = vmatprep.subr.mxu0 0.0
    %169 = vmatpush2.msra.mxu0 0.0
    %170 = vmatprep.subr.mxu0 0.0
    %171 = vmatpush2.msra.mxu0 0.0
    %172 = vmatprep.subr.mxu0 0.0
    %173 = vmatpush2.msra.mxu0 0.0
    %174 = vmatprep.subr.mxu0 0.0
    %175 = vmatpush2.msra.mxu0 0.0
    %176 = vmatprep.subr.mxu0 0.0
    %177 = vmatpush2.msra.mxu0 0.0
    %178 = vmatprep.subr.mxu0 0.0
    %179 = vmatpush2.msra.mxu0 0.0
    %180 = vmatprep.subr.mxu0 0.0
    %181 = vmatpush2.msra.mxu0 0.0
    %182 = vmatprep.subr.mxu0 0.0
    %183 = vmatpush2.msra.mxu0 0.0
    %184 = vmatprep.subr.mxu0 0.0
    %185 = vmatpush2.msra.mxu0 0.0
    %186 = vmatprep.subr.mxu0 0.0
    %187 = vmatpush2.msra.mxu0 0.0
    %188 = vmatprep.subr.mxu0 0.0
    %189 = vmatpush2.msra.mxu0 0.0
    %190 = vmatprep.subr.mxu0 0.0
    %191 = vmatpush2.msra.mxu0 0.0
    %192 = vmatprep.mubr.f32.mxu0 0.0
    %193 = vmatmul.mubr.f32.gmra.mxu0 %v126
    %v194 = vpop.f32.mrf.mxu0
    %v195 = vadd.f32 %v122, %v194
    %v196 = vpop.f32.mrf.mxu0
    %197 = vdwg.mxu0
    %v198 = vtanh.pop %v195
    %v199 = vld [vmem:[#allocation6] sm:$0xff]
    %v200 = vld [vmem:[#allocation6 + $0x8] sm:$0xff]
    %v201 = vld [vmem:[#allocation6 + $0x10] sm:$0xff]
    %v202 = vld [vmem:[#allocation6 + $0x18] sm:$0xff]
    %v203 = vld [vmem:[#allocation6 + $0x20] sm:$0xff]
    %v204 = vld [vmem:[#allocation6 + $0x28] sm:$0xff]
    %v205 = vld [vmem:[#allocation6 + $0x30] sm:$0xff]
    %v206 = vld [vmem:[#allocation6 + $0x38] sm:$0xff]
    %v207 = vld [vmem:[#allocation6 + $0x40] sm:$0xff]
    %v208 = vld [vmem:[#allocation6 + $0x48] sm:$0xff]
    %v209 = vld [vmem:[#allocation6 + $0x50] sm:$0xff]
    %v210 = vld [vmem:[#allocation6 + $0x58] sm:$0xff]
    %v211 = vld [vmem:[#allocation6 + $0x60] sm:$0xff]
    %v212 = vld [vmem:[#allocation6 + $0x68] sm:$0xff]
    %v213 = vld [vmem:[#allocation6 + $0x70] sm:$0xff]
    %v214 = vld [vmem:[#allocation6 + $0x78] sm:$0xff]
    %v215 = vld [vmem:[%s4] sm:$0x1]
    %v217 = vlaneseq
    %v218 = vshrl.u32 %v217, 7
    %v219 = vsub.s32 0, %v218
    %v220 = vrot.slane %v215, %v219
    %222 = vmatprep.subr.mxu0 0.0
    %223 = vmatpush1.msra.mxu0 %v214
    %224 = vmatprep.subr.mxu0 0.0
    %225 = vmatpush1.msra.mxu0 %v213
    %226 = vmatprep.subr.mxu0 0.0
    %227 = vmatpush1.msra.mxu0 %v212
    %228 = vmatprep.subr.mxu0 0.0
    %229 = vmatpush1.msra.mxu0 %v211
    %230 = vmatprep.subr.mxu0 0.0
    %231 = vmatpush1.msra.mxu0 %v210
    %232 = vmatprep.subr.mxu0 0.0
    %233 = vmatpush1.msra.mxu0 %v209
    %234 = vmatprep.subr.mxu0 0.0
    %235 = vmatpush1.msra.mxu0 %v208
    %236 = vmatprep.subr.mxu0 0.0
    %237 = vmatpush1.msra.mxu0 %v207
    %238 = vmatprep.subr.mxu0 0.0
    %239 = vmatpush1.msra.mxu0 %v206
    %240 = vmatprep.subr.mxu0 0.0
    %241 = vmatpush1.msra.mxu0 %v205
    %242 = vmatprep.subr.mxu0 0.0
    %243 = vmatpush1.msra.mxu0 %v204
    %244 = vmatprep.subr.mxu0 0.0
    %245 = vmatpush1.msra.mxu0 %v203
    %246 = vmatprep.subr.mxu0 0.0
    %247 = vmatpush1.msra.mxu0 %v202
    %248 = vmatprep.subr.mxu0 0.0
    %249 = vmatpush1.msra.mxu0 %v201
    %250 = vmatprep.subr.mxu0 0.0
    %251 = vmatpush1.msra.mxu0 %v200
    %252 = vmatprep.subr.mxu0 0.0
    %253 = vmatpush1.msra.mxu0 %v199
    %254 = vmatprep.subr.mxu0 0.0
    %255 = vmatpush2.msra.mxu0 0.0
    %256 = vmatprep.subr.mxu0 0.0
    %257 = vmatpush2.msra.mxu0 0.0
    %258 = vmatprep.subr.mxu0 0.0
    %259 = vmatpush2.msra.mxu0 0.0
    %260 = vmatprep.subr.mxu0 0.0
    %261 = vmatpush2.msra.mxu0 0.0
    %262 = vmatprep.subr.mxu0 0.0
    %263 = vmatpush2.msra.mxu0 0.0
    %264 = vmatprep.subr.mxu0 0.0
    %265 = vmatpush2.msra.mxu0 0.0
    %266 = vmatprep.subr.mxu0 0.0
    %267 = vmatpush2.msra.mxu0 0.0
    %268 = vmatprep.subr.mxu0 0.0
    %269 = vmatpush2.msra.mxu0 0.0
    %270 = vmatprep.subr.mxu0 0.0
    %271 = vmatpush2.msra.mxu0 0.0
    %272 = vmatprep.subr.mxu0 0.0
    %273 = vmatpush2.msra.mxu0 0.0
    %274 = vmatprep.subr.mxu0 0.0
    %275 = vmatpush2.msra.mxu0 0.0
    %276 = vmatprep.subr.mxu0 0.0
    %277 = vmatpush2.msra.mxu0 0.0
    %278 = vmatprep.subr.mxu0 0.0
    %279 = vmatpush2.msra.mxu0 0.0
    %280 = vmatprep.subr.mxu0 0.0
    %281 = vmatpush2.msra.mxu0 0.0
    %282 = vmatprep.subr.mxu0 0.0
    %283 = vmatpush2.msra.mxu0 0.0
    %284 = vmatprep.subr.mxu0 0.0
    %285 = vmatpush2.msra.mxu0 0.0
    %286 = vmatprep.mubr.f32.mxu0 0.0
    %287 = vmatmul.mubr.f32.gmra.mxu0 %v198
    %v288 = vpop.f32.mrf.mxu0
    %v289 = vadd.f32 %v220, %v288
    %v290 = vpop.f32.mrf.mxu0
    %291 = vdwg.mxu0
    %v292 = vtanh.pop %v289
    %v293 = vld [vmem:[#allocation8] sm:$0xff]
    %v294 = vld [vmem:[#allocation8 + $0x8] sm:$0xff]
    %v295 = vld [vmem:[#allocation8 + $0x10] sm:$0xff]
    %v296 = vld [vmem:[#allocation8 + $0x18] sm:$0xff]
    %v297 = vld [vmem:[#allocation8 + $0x20] sm:$0xff]
    %v298 = vld [vmem:[#allocation8 + $0x28] sm:$0xff]
    %v299 = vld [vmem:[#allocation8 + $0x30] sm:$0xff]
    %v300 = vld [vmem:[#allocation8 + $0x38] sm:$0xff]
    %v301 = vld [vmem:[#allocation8 + $0x40] sm:$0xff]
    %v302 = vld [vmem:[#allocation8 + $0x48] sm:$0xff]
    %v303 = vld [vmem:[#allocation8 + $0x50] sm:$0xff]
    %v304 = vld [vmem:[#allocation8 + $0x58] sm:$0xff]
    %v305 = vld [vmem:[#allocation8 + $0x60] sm:$0xff]
    %v306 = vld [vmem:[#allocation8 + $0x68] sm:$0xff]
    %v307 = vld [vmem:[#allocation8 + $0x70] sm:$0xff]
    %v308 = vld [vmem:[#allocation8 + $0x78] sm:$0xff]
    %v309 = vld [vmem:[%s6] sm:$0x1]
    %v311 = vlaneseq
    %v312 = vshrl.u32 %v311, 7
    %v313 = vsub.s32 0, %v312
    %v314 = vrot.slane %v309, %v313
    %316 = vmatprep.subr.mxu0 0.0
    %317 = vmatpush1.msra.mxu0 %v308
    %318 = vmatprep.subr.mxu0 0.0
    %319 = vmatpush1.msra.mxu0 %v307
    %320 = vmatprep.subr.mxu0 0.0
    %321 = vmatpush1.msra.mxu0 %v306
    %322 = vmatprep.subr.mxu0 0.0
    %323 = vmatpush1.msra.mxu0 %v305
    %324 = vmatprep.subr.mxu0 0.0
    %325 = vmatpush1.msra.mxu0 %v304
    %326 = vmatprep.subr.mxu0 0.0
    %327 = vmatpush1.msra.mxu0 %v303
    %328 = vmatprep.subr.mxu0 0.0
    %329 = vmatpush1.msra.mxu0 %v302
    %330 = vmatprep.subr.mxu0 0.0
    %331 = vmatpush1.msra.mxu0 %v301
    %332 = vmatprep.subr.mxu0 0.0
    %333 = vmatpush1.msra.mxu0 %v300
    %334 = vmatprep.subr.mxu0 0.0
    %335 = vmatpush1.msra.mxu0 %v299
    %336 = vmatprep.subr.mxu0 0.0
    %337 = vmatpush1.msra.mxu0 %v298
    %338 = vmatprep.subr.mxu0 0.0
    %339 = vmatpush1.msra.mxu0 %v297
    %340 = vmatprep.subr.mxu0 0.0
    %341 = vmatpush1.msra.mxu0 %v296
    %342 = vmatprep.subr.mxu0 0.0
    %343 = vmatpush1.msra.mxu0 %v295
    %344 = vmatprep.subr.mxu0 0.0
    %345 = vmatpush1.msra.mxu0 %v294
    %346 = vmatprep.subr.mxu0 0.0
    %347 = vmatpush1.msra.mxu0 %v293
    %348 = vmatprep.subr.mxu0 0.0
    %349 = vmatpush2.msra.mxu0 0.0
    %350 = vmatprep.subr.mxu0 0.0
    %351 = vmatpush2.msra.mxu0 0.0
    %352 = vmatprep.subr.mxu0 0.0
    %353 = vmatpush2.msra.mxu0 0.0
    %354 = vmatprep.subr.mxu0 0.0
    %355 = vmatpush2.msra.mxu0 0.0
    %356 = vmatprep.subr.mxu0 0.0
    %357 = vmatpush2.msra.mxu0 0.0
    %358 = vmatprep.subr.mxu0 0.0
    %359 = vmatpush2.msra.mxu0 0.0
    %360 = vmatprep.subr.mxu0 0.0
    %361 = vmatpush2.msra.mxu0 0.0
    %362 = vmatprep.subr.mxu0 0.0
    %363 = vmatpush2.msra.mxu0 0.0
    %364 = vmatprep.subr.mxu0 0.0
    %365 = vmatpush2.msra.mxu0 0.0
    %366 = vmatprep.subr.mxu0 0.0
    %367 = vmatpush2.msra.mxu0 0.0
    %368 = vmatprep.subr.mxu0 0.0
    %369 = vmatpush2.msra.mxu0 0.0
    %370 = vmatprep.subr.mxu0 0.0
    %371 = vmatpush2.msra.mxu0 0.0
    %372 = vmatprep.subr.mxu0 0.0
    %373 = vmatpush2.msra.mxu0 0.0
    %374 = vmatprep.subr.mxu0 0.0
    %375 = vmatpush2.msra.mxu0 0.0
    %376 = vmatprep.subr.mxu0 0.0
    %377 = vmatpush2.msra.mxu0 0.0
    %378 = vmatprep.subr.mxu0 0.0
    %379 = vmatpush2.msra.mxu0 0.0
    %380 = vmatprep.mubr.f32.mxu0 0.0
    %381 = vmatmul.mubr.f32.gmra.mxu0 %v292
    %v382 = vpop.f32.mrf.mxu0
    %v383 = vadd.f32 %v314, %v382
    %v384 = vpop.f32.mrf.mxu0
    %385 = vdwg.mxu0
    %v386 = vtanh.pop %v383
    %v387 = vld [vmem:[#allocation9] sm:$0xff]
    %v388 = vld [vmem:[#allocation9 + $0x8] sm:$0xff]
    %v389 = vld [vmem:[#allocation9 + $0x10] sm:$0xff]
    %v390 = vld [vmem:[#allocation9 + $0x18] sm:$0xff]
    %v391 = vld [vmem:[#allocation9 + $0x20] sm:$0xff]
    %v392 = vld [vmem:[#allocation9 + $0x28] sm:$0xff]
    %v393 = vld [vmem:[#allocation9 + $0x30] sm:$0xff]
    %v394 = vld [vmem:[#allocation9 + $0x38] sm:$0xff]
    %v395 = vld [vmem:[#allocation9 + $0x40] sm:$0xff]
    %v396 = vld [vmem:[#allocation9 + $0x48] sm:$0xff]
    %v397 = vld [vmem:[#allocation9 + $0x50] sm:$0xff]
    %v398 = vld [vmem:[#allocation9 + $0x58] sm:$0xff]
    %v399 = vld [vmem:[#allocation9 + $0x60] sm:$0xff]
    %v400 = vld [vmem:[#allocation9 + $0x68] sm:$0xff]
    %v401 = vld [vmem:[#allocation9 + $0x70] sm:$0xff]
    %v402 = vld [vmem:[#allocation9 + $0x78] sm:$0xff]
    %v403 = vld [vmem:[#allocation9 + $0x80] sm:$0xff]
    %v404 = vld [vmem:[#allocation9 + $0x88] sm:$0xff]
    %v405 = vld [vmem:[#allocation9 + $0x90] sm:$0xff]
    %v406 = vld [vmem:[#allocation9 + $0x98] sm:$0xff]
    %v407 = vld [vmem:[#allocation9 + $0xa0] sm:$0xff]
    %v408 = vld [vmem:[#allocation9 + $0xa8] sm:$0xff]
    %v409 = vld [vmem:[#allocation9 + $0xb0] sm:$0xff]
    %v410 = vld [vmem:[#allocation9 + $0xb8] sm:$0xff]
    %v411 = vld [vmem:[#allocation9 + $0xc0] sm:$0xff]
    %v412 = vld [vmem:[#allocation9 + $0xc8] sm:$0xff]
    %v413 = vld [vmem:[#allocation9 + $0xd0] sm:$0xff]
    %v414 = vld [vmem:[#allocation9 + $0xd8] sm:$0xff]
    %v415 = vld [vmem:[#allocation9 + $0xe0] sm:$0xff]
    %v416 = vld [vmem:[#allocation9 + $0xe8] sm:$0xff]
    %v417 = vld [vmem:[#allocation9 + $0xf0] sm:$0xff]
    %v418 = vld [vmem:[#allocation9 + $0xf8] sm:$0xff]
    %v419 = vld [vmem:[%s8] sm:$0x3]
    %v421 = vlaneseq
    %v422 = vshrl.u32 %v421, 7
    %v423 = vsub.s32 0, %v422
    %v424 = vrot.slane %v419, %v423
    %v425 = vlaneseq
    %v426 = vshrl.u32 %v425, 7
    %v427 = vsub.s32 1, %v426
    %v428 = vrot.slane %v419, %v427
    %431 = vmatprep.subr.mxu0 %v418
    %432 = vmatpush1.msra.mxu0 %v417
    %433 = vmatprep.subr.mxu0 %v416
    %434 = vmatpush1.msra.mxu0 %v415
    %435 = vmatprep.subr.mxu0 %v414
    %436 = vmatpush1.msra.mxu0 %v413
    %437 = vmatprep.subr.mxu0 %v412
    %438 = vmatpush1.msra.mxu0 %v411
    %439 = vmatprep.subr.mxu0 %v410
    %440 = vmatpush1.msra.mxu0 %v409
    %441 = vmatprep.subr.mxu0 %v408
    %442 = vmatpush1.msra.mxu0 %v407
    %443 = vmatprep.subr.mxu0 %v406
    %444 = vmatpush1.msra.mxu0 %v405
    %445 = vmatprep.subr.mxu0 %v404
    %446 = vmatpush1.msra.mxu0 %v403
    %447 = vmatprep.subr.mxu0 %v402
    %448 = vmatpush1.msra.mxu0 %v401
    %449 = vmatprep.subr.mxu0 %v400
    %450 = vmatpush1.msra.mxu0 %v399
    %451 = vmatprep.subr.mxu0 %v398
    %452 = vmatpush1.msra.mxu0 %v397
    %453 = vmatprep.subr.mxu0 %v396
    %454 = vmatpush1.msra.mxu0 %v395
    %455 = vmatprep.subr.mxu0 %v394
    %456 = vmatpush1.msra.mxu0 %v393
    %457 = vmatprep.subr.mxu0 %v392
    %458 = vmatpush1.msra.mxu0 %v391
    %459 = vmatprep.subr.mxu0 %v390
    %460 = vmatpush1.msra.mxu0 %v389
    %461 = vmatprep.subr.mxu0 %v388
    %462 = vmatpush1.msra.mxu0 %v387
    %463 = vmatprep.subr.mxu0 0.0
    %464 = vmatpush2.msra.mxu0 0.0
    %465 = vmatprep.subr.mxu0 0.0
    %466 = vmatpush2.msra.mxu0 0.0
    %467 = vmatprep.subr.mxu0 0.0
    %468 = vmatpush2.msra.mxu0 0.0
    %469 = vmatprep.subr.mxu0 0.0
    %470 = vmatpush2.msra.mxu0 0.0
    %471 = vmatprep.subr.mxu0 0.0
    %472 = vmatpush2.msra.mxu0 0.0
    %473 = vmatprep.subr.mxu0 0.0
    %474 = vmatpush2.msra.mxu0 0.0
    %475 = vmatprep.subr.mxu0 0.0
    %476 = vmatpush2.msra.mxu0 0.0
    %477 = vmatprep.subr.mxu0 0.0
    %478 = vmatpush2.msra.mxu0 0.0
    %479 = vmatprep.subr.mxu0 0.0
    %480 = vmatpush2.msra.mxu0 0.0
    %481 = vmatprep.subr.mxu0 0.0
    %482 = vmatpush2.msra.mxu0 0.0
    %483 = vmatprep.subr.mxu0 0.0
    %484 = vmatpush2.msra.mxu0 0.0
    %485 = vmatprep.subr.mxu0 0.0
    %486 = vmatpush2.msra.mxu0 0.0
    %487 = vmatprep.subr.mxu0 0.0
    %488 = vmatpush2.msra.mxu0 0.0
    %489 = vmatprep.subr.mxu0 0.0
    %490 = vmatpush2.msra.mxu0 0.0
    %491 = vmatprep.subr.mxu0 0.0
    %492 = vmatpush2.msra.mxu0 0.0
    %493 = vmatprep.subr.mxu0 0.0
    %494 = vmatpush2.msra.mxu0 0.0
    %495 = vmatprep.mubr.f32.mxu0 0.0
    %496 = vmatmul.mubr.f32.gmra.mxu0 %v386
    %v497 = vpop.f32.mrf.mxu0
    %v498 = vadd.f32 %v424, %v497
    %v499 = vpop.f32.mrf.mxu0
    %v500 = vadd.f32 %v428, %v499
    %501 = vdwg.mxu0
    %v502 = vld [vmem:[#allocation11] sm:$0xff]
    %v503 = vld [vmem:[#allocation11 + $0x8] sm:$0xff]
    %v504 = vld [vmem:[#allocation11 + $0x10] sm:$0xff]
    %v505 = vld [vmem:[#allocation11 + $0x18] sm:$0xff]
    %v506 = vld [vmem:[#allocation11 + $0x20] sm:$0xff]
    %v507 = vld [vmem:[#allocation11 + $0x28] sm:$0xff]
    %v508 = vld [vmem:[#allocation11 + $0x30] sm:$0xff]
    %v509 = vld [vmem:[#allocation11 + $0x38] sm:$0xff]
    %v510 = vld [vmem:[#allocation11 + $0x40] sm:$0xff]
    %v511 = vld [vmem:[#allocation11 + $0x48] sm:$0xff]
    %v512 = vld [vmem:[#allocation11 + $0x50] sm:$0xff]
    %v513 = vld [vmem:[#allocation11 + $0x58] sm:$0xff]
    %v514 = vld [vmem:[#allocation11 + $0x60] sm:$0xff]
    %v515 = vld [vmem:[#allocation11 + $0x68] sm:$0xff]
    %v516 = vld [vmem:[#allocation11 + $0x70] sm:$0xff]
    %v517 = vld [vmem:[#allocation11 + $0x78] sm:$0xff]
    %v518 = vld [vmem:[#allocation11 + $0x80] sm:$0xff]
    %v519 = vld [vmem:[#allocation11 + $0x88] sm:$0xff]
    %v520 = vld [vmem:[#allocation11 + $0x90] sm:$0xff]
    %v521 = vld [vmem:[#allocation11 + $0x98] sm:$0xff]
    %v522 = vld [vmem:[#allocation11 + $0xa0] sm:$0xff]
    %v523 = vld [vmem:[#allocation11 + $0xa8] sm:$0xff]
    %v524 = vld [vmem:[#allocation11 + $0xb0] sm:$0xff]
    %v525 = vld [vmem:[#allocation11 + $0xb8] sm:$0xff]
    %v526 = vld [vmem:[#allocation11 + $0xc0] sm:$0xff]
    %v527 = vld [vmem:[#allocation11 + $0xc8] sm:$0xff]
    %v528 = vld [vmem:[#allocation11 + $0xd0] sm:$0xff]
    %v529 = vld [vmem:[#allocation11 + $0xd8] sm:$0xff]
    %v530 = vld [vmem:[#allocation11 + $0xe0] sm:$0xff]
    %v531 = vld [vmem:[#allocation11 + $0xe8] sm:$0xff]
    %v532 = vld [vmem:[#allocation11 + $0xf0] sm:$0xff]
    %v533 = vld [vmem:[#allocation11 + $0xf8] sm:$0xff]
    %534 = vmatprep.subr.mxu0 %v533
    %535 = vmatpush1.xpose.msra.mxu0 %v532
    %536 = vmatprep.subr.mxu0 %v531
    %537 = vmatpush1.xpose.msra.mxu0 %v530
    %538 = vmatprep.subr.mxu0 %v529
    %539 = vmatpush1.xpose.msra.mxu0 %v528
    %540 = vmatprep.subr.mxu0 %v527
    %541 = vmatpush1.xpose.msra.mxu0 %v526
    %542 = vmatprep.subr.mxu0 %v525
    %543 = vmatpush1.xpose.msra.mxu0 %v524
    %544 = vmatprep.subr.mxu0 %v523
    %545 = vmatpush1.xpose.msra.mxu0 %v522
    %546 = vmatprep.subr.mxu0 %v521
    %547 = vmatpush1.xpose.msra.mxu0 %v520
    %548 = vmatprep.subr.mxu0 %v519
    %549 = vmatpush1.xpose.msra.mxu0 %v518
    %550 = vmatprep.subr.mxu0 %v517
    %551 = vmatpush1.xpose.msra.mxu0 %v516
    %552 = vmatprep.subr.mxu0 %v515
    %553 = vmatpush1.xpose.msra.mxu0 %v514
    %554 = vmatprep.subr.mxu0 %v513
    %555 = vmatpush1.xpose.msra.mxu0 %v512
    %556 = vmatprep.subr.mxu0 %v511
    %557 = vmatpush1.xpose.msra.mxu0 %v510
    %558 = vmatprep.subr.mxu0 %v509
    %559 = vmatpush1.xpose.msra.mxu0 %v508
    %560 = vmatprep.subr.mxu0 %v507
    %561 = vmatpush1.xpose.msra.mxu0 %v506
    %562 = vmatprep.subr.mxu0 %v505
    %563 = vmatpush1.xpose.msra.mxu0 %v504
    %564 = vmatprep.subr.mxu0 %v503
    %565 = vmatpush1.xpose.msra.mxu0 %v502
    %566 = vmatprep.subr.mxu0 0.0
    %567 = vmatpush2.xpose.msra.mxu0 0.0
    %568 = vmatprep.subr.mxu0 0.0
    %569 = vmatpush2.xpose.msra.mxu0 0.0
    %570 = vmatprep.subr.mxu0 0.0
    %571 = vmatpush2.xpose.msra.mxu0 0.0
    %572 = vmatprep.subr.mxu0 0.0
    %573 = vmatpush2.xpose.msra.mxu0 0.0
    %574 = vmatprep.subr.mxu0 0.0
    %575 = vmatpush2.xpose.msra.mxu0 0.0
    %576 = vmatprep.subr.mxu0 0.0
    %577 = vmatpush2.xpose.msra.mxu0 0.0
    %578 = vmatprep.subr.mxu0 0.0
    %579 = vmatpush2.xpose.msra.mxu0 0.0
    %580 = vmatprep.subr.mxu0 0.0
    %581 = vmatpush2.xpose.msra.mxu0 0.0
    %582 = vmatprep.subr.mxu0 0.0
    %583 = vmatpush2.xpose.msra.mxu0 0.0
    %584 = vmatprep.subr.mxu0 0.0
    %585 = vmatpush2.xpose.msra.mxu0 0.0
    %586 = vmatprep.subr.mxu0 0.0
    %587 = vmatpush2.xpose.msra.mxu0 0.0
    %588 = vmatprep.subr.mxu0 0.0
    %589 = vmatpush2.xpose.msra.mxu0 0.0
    %590 = vmatprep.subr.mxu0 0.0
    %591 = vmatpush2.xpose.msra.mxu0 0.0
    %592 = vmatprep.subr.mxu0 0.0
    %593 = vmatpush2.xpose.msra.mxu0 0.0
    %594 = vmatprep.subr.mxu0 0.0
    %595 = vmatpush2.xpose.msra.mxu0 0.0
    %596 = vmatprep.subr.mxu0 0.0
    %597 = vmatpush2.xpose.msra.mxu0 0.0
    %598 = vmatprep.mubr.f32.mxu0 %v500
    %599 = vmatmul.mubr.f32.gmra.mxu0 %v498
    %v600 = vpop.f32.mrf.mxu0
    %v601 = vadd.f32 0.0, %v600
    %v602 = vpop.f32.mrf.mxu0
    %603 = vdwg.mxu0
    %604 = vst [vmem:[#allocation12] sm:$0x3] %v601
    %v605 = vld [vmem:[%s10] sm:$0x3]
    %v607 = vlaneseq
    %v608 = vshrl.u32 %v607, 7
    %v609 = vsub.s32 0, %v608
    %v610 = vrot.slane %v605, %v609
    %v611 = vlaneseq
    %v612 = vshrl.u32 %v611, 7
    %v613 = vsub.s32 1, %v612
    %v614 = vrot.slane %v605, %v613
    %v617 = vmul.f32 %v498, %v610
    %v618 = vmul.f32 %v500, %v614
    %vm619 = vcmask 1041408
    %v620 = vsel %vm619, %v617, 0.0
    %v621 = vsel %vm619, %v618, 0.0
    %v622 = vadd.f32 %v620, %v621
    %623 = vadd.xlane.f32.xlu0 %v622
    %v624 = vpop.xlane.xlu0 %623
    %v625 = vld [vmem:[#allocation2] sm:$0x1]
    %v627 = vlaneseq
    %v628 = vshrl.u32 %v627, 7
    %v629 = vsub.s32 0, %v628
    %v630 = vrot.slane %v625, %v629
    %v632 = vadd.f32 %v624, %v630
    %vm633 = vcmask 1024
    %634 = vst.msk [vmem:[%s13] sm:$0x3] %vm633, %v632
    // Predicated region
    $region70: #{tpu_custom_call.1} parent=1 // pred_check
      _
    $region71: #{tpu_custom_call.1} parent=1 // pred_check_branch
      %636 = sbr.rel (0) target = $region73
    $region72: #{tpu_custom_call.1} parent=1 // pred_region
      %s638 = ssub.s32 32, 32
      %639 = vsyncadd [#allocation5], %s638
      %s641 = sshll.u32 [#allocation12], 4
      %s642 = int_to_ptr.vmem [resolvable:$true] %s641
      %644 = dma.vmem_to_hbm [thread:$0]  %s642, 32, %s12, [#allocation5]
    $region73: #{tpu_custom_call.1} parent=1 // pred_fallthru
      _
    // Predicated region
    $region74: #{tpu_custom_call.1} parent=1 // pred_check
      _
    $region75: #{tpu_custom_call.1} parent=1 // pred_check_branch
      %646 = sbr.rel (0) target = $region77
    $region76: #{tpu_custom_call.1} parent=1 // pred_region
      _
    $region77: #{tpu_custom_call.1} parent=1 // pred_fallthru
      _
    // Predicated region
    $region78: #{tpu_custom_call.1} parent=1 // pred_check
      _
    $region79: #{tpu_custom_call.1} parent=1 // pred_check_branch
      %648 = sbr.rel (0) target = $region81
    $region80: #{tpu_custom_call.1} parent=1 // pred_region
      %649 = dma.done [#allocation5], 32
    $region81: #{tpu_custom_call.1} parent=1 // pred_fallthru
      _
    // Predicated region
    $region82: #{tpu_custom_call.1} parent=1 // pred_check
      _
    $region83: #{tpu_custom_call.1} parent=1 // pred_check_branch
      %651 = sbr.rel (0) target = $region85
    $region84: #{tpu_custom_call.1} parent=1 // pred_region
      _
    $region85: #{tpu_custom_call.1} parent=1 // pred_fallthru
      _
    %652 = vsyncpa [#allocation4], 1
    %653 = vsyncpa [#allocation7], 1
    %654 = vsyncpa [#allocation10], 1
    %655 = vsyncpa [#allocation5], 1

</llo_original>
